<compile_context>
chip_gen: v7x
topology: tpu7x:2x2x1
jax: 0.10.0
libtpu: 0.0.40
codegen_flags: <defaults>
</compile_context>

<pallas_src>
import math
import functools

import jax
import jax.numpy as jnp
from jax.experimental import pallas as pl
from jax.experimental.pallas import tpu as pltpu


def _vmem_limit_bytes():
    """Per-generation VMEM budget: ~96 MiB on v5e/v6e, ~48 MiB on v7x."""
    cap = 64 * 1024 * 1024
    try:
        info = pltpu.get_tpu_info()
        cap = int(getattr(info, "vmem_capacity_bytes", cap))
    except Exception:
        pass
    return max(32 * 1024 * 1024, min(cap * 3 // 4, 100 * 1024 * 1024))


def _choose_batch_tile(B, requested):
    """Largest divisor of B <= requested, keeping >= 2 parallel grid steps."""
    bt = max(1, min(requested, B))
    while B % bt:
        bt -= 1
    if bt > 1 and B // bt < 2:          # keep both TCs fed on v7x megacore
        bt = max(1, bt // 2)
        while B % bt:
            bt -= 1
    return bt


# ----------------------------------------------------------------------------
# Patch embedding + cls token + positional embedding, fused.
# Conv2d(k=P, stride=P) == matmul of channel-major flattened patches.
# Grid over batch ("parallel"); one (S, D) token tile written per step with a
# single full-tile (unmasked) store.
# ----------------------------------------------------------------------------
def _embed_kernel(p_ref, w_ref, b_ref, cls_ref, pe_ref, o_ref):
    pe = pe_ref[...]                                                  # (S, D)
    emb = jnp.dot(p_ref[...], w_ref[...],
                  preferred_element_type=jnp.float32) + b_ref[...]    # (N, D)
    row0 = cls_ref[...] + pe[0:1, :]                                  # (1, D)
    rest = emb + pe[1:, :]                                            # (N, D)
    o_ref[...] = jnp.concatenate([row0, rest], axis=0).astype(o_ref.dtype)


def embed_tokens(patches, w_t, bias, cls, pe):
    B, N, CPP = patches.shape
    D = w_t.shape[1]
    S = N + 1
    return pl.pallas_call(
        _embed_kernel,
        out_shape=jax.ShapeDtypeStruct((B, S, D), jnp.float32),
        grid=(B,),
        in_specs=[
            pl.BlockSpec((None, N, CPP), lambda b: (b, 0, 0)),
            pl.BlockSpec((CPP, D), lambda b: (0, 0)),
            pl.BlockSpec((1, D), lambda b: (0, 0)),
            pl.BlockSpec((1, D), lambda b: (0, 0)),
            pl.BlockSpec((S, D), lambda b: (0, 0)),
        ],
        out_specs=pl.BlockSpec((None, S, D), lambda b: (b, 0, 0)),
        compiler_params=pltpu.CompilerParams(
            dimension_semantics=("parallel",),
            vmem_limit_bytes=_vmem_limit_bytes()),
    )(patches, w_t, bias, cls, pe)


# ----------------------------------------------------------------------------
# All L BasicTransformerBlocks fused into one kernel.
#   grid = (B//Bt, L): batch-tile axis outer/"parallel", layer axis inner/
#   "arbitrary". Token state for the Bt samples is a resident VMEM scratch
#   (initialized from the input tokens at l == 0, updated in place each layer);
#   per-layer stacked weights are DMA'd once per (batch-tile, layer) step
#   (double-buffered by BlockSpec), so weight HBM traffic is amortized over Bt.
#   Only the cls rows are emitted, at the last layer.
# ----------------------------------------------------------------------------
def _layers_kernel(n_heads, bt,
                   x_ref, g1_ref, b1_ref,
                   wqkv_ref, bqkv_ref, wo_ref, bo_ref,
                   g2_ref, b2_ref,
                   w1_ref, bm1_ref, w2_ref, bm2_ref,
                   o_ref, state_ref):
    eps = 1e-5
    inv_sqrt2 = 1.0 / math.sqrt(2.0)
    l = pl.program_id(1)

    @pl.when(l == 0)
    def _():
        state_ref[...] = x_ref[...]

    # Layer weights: fetched once per grid step, reused for all Bt samples.
    g1, b1 = g1_ref[...], b1_ref[...]
    wqkv, bqkv = wqkv_ref[...], bqkv_ref[...]
    wo, bo = wo_ref[...], bo_ref[...]
    g2, b2 = g2_ref[...], b2_ref[...]
    w1, bm1 = w1_ref[...], bm1_ref[...]
    w2, bm2 = w2_ref[...], bm2_ref[...]
    wdt = wqkv.dtype

    D = wo.shape[-1]
    Dh = D // n_heads

    def dot(a, w):
        # activations follow the stored weight dtype (f32 default, bf16 option)
        return jnp.dot(a.astype(wdt), w, preferred_element_type=jnp.float32)

    # TODO(synk): at real sizes (12+ heads, Bt > 4, mlp=3072) switch these static
    # Python loops to lax.fori_loop(..., unroll=True) / head-batched dot_general,
    # and chunk the w1/w2 DMA (pl.Buffered(1) or emit_pipeline over mlp chunks)
    # so only (D, chunk)+(chunk, D) weight slabs are resident (v7x 64 MiB VMEM).
    for b in range(bt):
        x = state_ref[b]                                          # (S, D) f32

        # --- LayerNorm 1 (biased variance, eps=1e-5) ---
        mu = jnp.mean(x, axis=-1, keepdims=True)
        var = jnp.mean((x - mu) ** 2, axis=-1, keepdims=True)
        xn = (x - mu) * jax.lax.rsqrt(var + eps) * g1 + b1

        # --- Multi-head self-attention (nn.MultiheadAttention semantics) ---
        # 1/sqrt(Dh) is folded into the q columns of wqkv/bqkv at prepare time.
        qkv = dot(xn, wqkv) + bqkv                                # (S, 3D), K=D
        ctx = []
        for h in range(n_heads):
            # TODO(synk): at Dh not a multiple of 128 these lane slices cost
            # relayouts; a (3, n_heads, D, Dh) weight layout + batched
            # dot_general removes them at real sizes.
            q = qkv[:, h * Dh:(h + 1) * Dh]
            k = qkv[:, D + h * Dh:D + (h + 1) * Dh]
            v = qkv[:, 2 * D + h * Dh:2 * D + (h + 1) * Dh]
            s = jax.lax.dot_general(q, k, (((1,), (1,)), ((), ())),
                                    preferred_element_type=jnp.float32)  # (S, S)
            s = s - jnp.max(s, axis=-1, keepdims=True)
            e = jnp.exp(s)
            p = e * pl.reciprocal(jnp.sum(e, axis=-1, keepdims=True),
                                  approx=True)
            ctx.append(jnp.dot(p, v, preferred_element_type=jnp.float32))
        # Single full-depth (K=D) output projection (no per-head K=Dh matmuls).
        attn = dot(jnp.concatenate(ctx, axis=-1), wo) + bo
        x2 = x + attn

        # --- LayerNorm 2 ---
        mu2 = jnp.mean(x2, axis=-1, keepdims=True)
        var2 = jnp.mean((x2 - mu2) ** 2, axis=-1, keepdims=True)
        x3 = (x2 - mu2) * jax.lax.rsqrt(var2 + eps) * g2 + b2

        # --- MLP: Linear -> exact (erf) GELU -> Linear ---
        h1 = dot(x3, w1) + bm1
        h1 = 0.5 * h1 * (1.0 + jax.lax.erf(h1 * inv_sqrt2))
        y = dot(h1, w2) + bm2

        state_ref[b] = x2 + y

    # Only the cls row is consumed downstream: emit just that, once.
    @pl.when(l == pl.num_programs(1) - 1)
    def _():
        o_ref[...] = state_ref[:, 0:1, :]


def transformer_layers(tokens, pp, n_heads, batch_tile):
    B, S, D = tokens.shape
    L = pp['wqkv_t'].shape[0]
    mlp = pp['w1_t'].shape[-1]
    bt = batch_tile

    def wspec(shape):
        return pl.BlockSpec((None,) + shape, lambda b, l: (l, 0, 0))

    tok_spec = pl.BlockSpec((bt, S, D), lambda b, l: (b, 0, 0))
    cls_spec = pl.BlockSpec((bt, 1, D), lambda b, l: (b, 0, 0))

    in_specs = [
        tok_spec,
        wspec((1, D)),         # g1
        wspec((1, D)),         # b1
        wspec((D, 3 * D)),     # wqkv_t (scale folded into q columns)
        wspec((1, 3 * D)),     # bqkv
        wspec((D, D)),         # wo_t
        wspec((1, D)),         # bo
        wspec((1, D)),         # g2
        wspec((1, D)),         # b2
        wspec((D, mlp)),       # w1_t
        wspec((1, mlp)),       # bm1
        wspec((mlp, D)),       # w2_t
        wspec((1, D)),         # bm2
    ]

    out = pl.pallas_call(
        functools.partial(_layers_kernel, n_heads, bt),
        out_shape=jax.ShapeDtypeStruct((B, 1, D), jnp.float32),
        grid=(B // bt, L),
        in_specs=in_specs,
        out_specs=cls_spec,
        scratch_shapes=[pltpu.VMEM((bt, S, D), jnp.float32)],
        compiler_params=pltpu.CompilerParams(
            dimension_semantics=("parallel", "arbitrary"),
            vmem_limit_bytes=_vmem_limit_bytes()),
    )(tokens, pp['g1'], pp['b1'], pp['wqkv_t'], pp['bqkv'], pp['wo_t'], pp['bo'],
      pp['g2'], pp['b2'], pp['w1_t'], pp['bm1'], pp['w2_t'], pp['bm2'])
    return out[:, 0, :]                                           # (B, D)


# ----------------------------------------------------------------------------
# Sinusoidal positional embedding table (same formula as the PyTorch loop).
# ----------------------------------------------------------------------------
def positional_embedding_table(max_patch_num, D):
    p = jnp.arange(max_patch_num, dtype=jnp.float32)[:, None]
    i = jnp.arange(D, dtype=jnp.float32)[None, :]
    even = (jnp.arange(D) % 2) == 0
    expo = jnp.where(even, i, i - 1.0) / D
    angle = p / jnp.power(10000.0, expo)
    pe = jnp.where(even[None, :], jnp.sin(angle), jnp.cos(angle))
    return pe  # (max_patch_num, D)


# ----------------------------------------------------------------------------
# One-time parameter preparation: stack layers, pre-transpose weights, reshape
# biases, fold the 1/sqrt(Dh) attention scale into the q projection, and
# optionally store the large weight stacks in bf16 (intentional numerics change;
# default f32 matches PyTorch exactly).
# ----------------------------------------------------------------------------
def prepare_params(raw, n_heads, weights_dtype=jnp.float32):
    D = raw['conv_w'].shape[0]
    scale = 1.0 / math.sqrt(D // n_heads)

    def stack(fn):
        return jnp.stack([fn(lp) for lp in raw['layers']], axis=0)

    wqkv_t = stack(lambda lp: lp['wqkv'].T)                 # (L, D, 3D)
    wqkv_t = wqkv_t.at[:, :, :D].multiply(scale)            # fold scale into q
    bqkv = stack(lambda lp: lp['bqkv'].reshape(1, -1))      # (L, 1, 3D)
    bqkv = bqkv.at[:, :, :D].multiply(scale)

    return {
        'w_patch': raw['conv_w'].reshape(D, -1).T,          # (C*P*P, D)
        'b_patch': raw['conv_b'].reshape(1, D),
        'cls': raw['cls'].reshape(1, D),
        'PE': raw['PE'],                                    # (max_patch_num, D)
        'g1': stack(lambda lp: lp['g1'].reshape(1, D)),
        'b1': stack(lambda lp: lp['b1'].reshape(1, D)),
        'wqkv_t': wqkv_t.astype(weights_dtype),
        'bqkv': bqkv,
        'wo_t': stack(lambda lp: lp['wo'].T).astype(weights_dtype),   # (L, D, D)
        'bo': stack(lambda lp: lp['bo'].reshape(1, D)),
        'g2': stack(lambda lp: lp['g2'].reshape(1, D)),
        'b2': stack(lambda lp: lp['b2'].reshape(1, D)),
        'w1_t': stack(lambda lp: lp['w1'].T).astype(weights_dtype),   # (L, D, mlp)
        'bm1': stack(lambda lp: lp['bm1'].reshape(1, -1)),            # (L, 1, mlp)
        'w2_t': stack(lambda lp: lp['w2'].T).astype(weights_dtype),   # (L, mlp, D)
        'bm2': stack(lambda lp: lp['bm2'].reshape(1, D)),
    }


# ----------------------------------------------------------------------------
# Full ViTBackbone forward.
# ----------------------------------------------------------------------------
def vit_backbone(x, pp, patch_size, n_heads, batch_tile=8):
    B, C, H, W = x.shape
    P = patch_size
    gh, gw = H // P, W // P
    N = gh * gw
    S = N + 1

    # patchify glue: (B,C,H,W) -> (B, N, C*P*P), channel-major per patch
    # (matches torch Conv2d weight layout (D, C, P, P)).
    # TODO(synk): fold this NCHW gather into the embed kernel via a (B, gh, gw)
    # grid with Element-indexed BlockSpecs to avoid the extra XLA transpose pass.
    patches = (x.reshape(B, C, gh, P, gw, P)
                 .transpose(0, 2, 4, 1, 3, 5)
                 .reshape(B, N, C * P * P))

    tokens = embed_tokens(patches, pp['w_patch'], pp['b_patch'],
                          pp['cls'], pp['PE'][:S])          # (B, S, D)

    bt = _choose_batch_tile(B, batch_tile)
    return transformer_layers(tokens, pp, n_heads, bt)      # (B, D)


# ----------------------------------------------------------------------------
# Deterministic parameter init (PyTorch layout) + run.
# ----------------------------------------------------------------------------
def init_params(key, in_channels, D, P, max_patch_num, L, mlp_size):
    def nrm(k, shape, scale=0.02):
        return scale * jax.random.normal(k, shape, dtype=jnp.float32)

    keys = jax.random.split(key, 3 + 6 * L)
    params = {
        'conv_w': nrm(keys[0], (D, in_channels, P, P)),
        'conv_b': nrm(keys[1], (D,)),
        'cls': jax.random.normal(keys[2], (1, 1, D), dtype=jnp.float32),
        'PE': positional_embedding_table(max_patch_num, D),
        'layers': [],
    }
    for l in range(L):
        k = keys[3 + 6 * l: 3 + 6 * (l + 1)]
        params['layers'].append({
            'g1': jnp.ones((D,), jnp.float32), 'b1': jnp.zeros((D,), jnp.float32),
            'wqkv': nrm(k[0], (3 * D, D)), 'bqkv': nrm(k[1], (3 * D,)),
            'wo': nrm(k[2], (D, D)), 'bo': nrm(k[3], (D,)),
            'g2': jnp.ones((D,), jnp.float32), 'b2': jnp.zeros((D,), jnp.float32),
            'w1': nrm(k[4], (mlp_size, D)), 'bm1': jnp.zeros((mlp_size,), jnp.float32),
            'w2': nrm(k[5], (D, mlp_size)), 'bm2': jnp.zeros((D,), jnp.float32),
        })
    return params


if __name__ == "__main__":
    # small config consistent with the module
    B, C, H, W = 2, 4, 16, 16
    P = 8                 # -> 2x2 = 4 patches, seq = 5 with cls token
    D = 32
    n_heads = 4
    mlp_size = 64
    L = 2
    max_patch_num = 16

    key = jax.random.PRNGKey(0)
    pkey, xkey = jax.random.split(key)
    raw_params = init_params(pkey, C, D, P, max_patch_num, L, mlp_size)
    # weights_dtype=jnp.bfloat16 halves weight HBM/VMEM on v6e/v7x (numerics change)
    params = prepare_params(raw_params, n_heads, weights_dtype=jnp.float32)
    x = jax.random.normal(xkey, (B, C, H, W), dtype=jnp.float32)

    out = vit_backbone(x, params, P, n_heads)
    out = jax.block_until_ready(out)
    assert out.shape == (B, D), out.shape
    print("KERNEL_OK")
</pallas_src>

<mosaic_0001>
module attributes {stable_mosaic.version = 11 : i64} {
  func.func @_embed_kernel(%arg0: i32, %arg1: memref<1x4x256xf32, #tpu.memory_space<vmem>>, %arg2: memref<256x32xf32, #tpu.memory_space<vmem>>, %arg3: memref<1x32xf32, #tpu.memory_space<vmem>>, %arg4: memref<1x32xf32, #tpu.memory_space<vmem>>, %arg5: memref<5x32xf32, #tpu.memory_space<vmem>>, %arg6: memref<1x5x32xf32, #tpu.memory_space<vmem>>) attributes {dimension_semantics = [#tpu.dimension_semantics<parallel>], iteration_bounds = array<i64: 2>, scalar_prefetch = 0 : i64, scratch_operands = 0 : i64, tpu.core_type = #tpu.core_type<tc>, window_params = [{transform_indices = @transform_0, window_bounds = array<i64: 1, 4, 256>}, {pipeline_mode = #tpu.pipeline_mode<synchronous>, transform_indices = @transform_1, window_bounds = array<i64: 256, 32>}, {pipeline_mode = #tpu.pipeline_mode<synchronous>, transform_indices = @transform_2, window_bounds = array<i64: 1, 32>}, {pipeline_mode = #tpu.pipeline_mode<synchronous>, transform_indices = @transform_3, window_bounds = array<i64: 1, 32>}, {pipeline_mode = #tpu.pipeline_mode<synchronous>, transform_indices = @transform_4, window_bounds = array<i64: 5, 32>}, {transform_indices = @transform_5, window_bounds = array<i64: 1, 5, 32>}]} {
    %c0 = arith.constant 0 : index
    %c0_0 = arith.constant 0 : index
    %0 = vector.load %arg5[%c0, %c0_0] : memref<5x32xf32, #tpu.memory_space<vmem>>, vector<5x32xf32>
    %c0_1 = arith.constant 0 : index
    %c0_2 = arith.constant 0 : index
    %c0_3 = arith.constant 0 : index
    %1 = vector.load %arg1[%c0_1, %c0_2, %c0_3] : memref<1x4x256xf32, #tpu.memory_space<vmem>>, vector<1x4x256xf32>
    %2 = vector.shape_cast %1 : vector<1x4x256xf32> to vector<4x256xf32>
    %c0_4 = arith.constant 0 : index
    %c0_5 = arith.constant 0 : index
    %3 = vector.load %arg2[%c0_4, %c0_5] : memref<256x32xf32, #tpu.memory_space<vmem>>, vector<256x32xf32>
    %cst = arith.constant dense<0.000000e+00> : vector<4x32xf32>
    %4 = tpu.matmul %2, %3, %cst {dimension_numbers = #tpu.dot_dimension_numbers<[1], [0], [0], [1], [0, 0, 1, 1], [], []>} : vector<4x256xf32>, vector<256x32xf32>, vector<4x32xf32> -> vector<4x32xf32>
    %c0_6 = arith.constant 0 : index
    %c0_7 = arith.constant 0 : index
    %5 = vector.load %arg3[%c0_6, %c0_7] : memref<1x32xf32, #tpu.memory_space<vmem>>, vector<1x32xf32>
    %6 = vector.broadcast %5 : vector<1x32xf32> to vector<4x32xf32>
    %7 = arith.addf %4, %6 : vector<4x32xf32>
    %c0_8 = arith.constant 0 : index
    %c0_9 = arith.constant 0 : index
    %8 = vector.load %arg4[%c0_8, %c0_9] : memref<1x32xf32, #tpu.memory_space<vmem>>, vector<1x32xf32>
    %9 = vector.extract_strided_slice %0 {offsets = [0, 0], sizes = [1, 32], strides = [1, 1]} : vector<5x32xf32> to vector<1x32xf32>
    %10 = arith.addf %8, %9 : vector<1x32xf32>
    %11 = vector.extract_strided_slice %0 {offsets = [1, 0], sizes = [4, 32], strides = [1, 1]} : vector<5x32xf32> to vector<4x32xf32>
    %12 = arith.addf %7, %11 : vector<4x32xf32>
    %13 = tpu.concatenate %10, %12 in 0 : vector<1x32xf32>, vector<4x32xf32> -> vector<5x32xf32>
    %c0_10 = arith.constant 0 : index
    %c0_11 = arith.constant 0 : index
    %c0_12 = arith.constant 0 : index
    %14 = vector.load %arg6[%c0_10, %c0_11, %c0_12] : memref<1x5x32xf32, #tpu.memory_space<vmem>>, vector<1x5x32xf32>
    %15 = vector.shape_cast %14 : vector<1x5x32xf32> to vector<5x32xf32>
    %16 = vector.shape_cast %13 : vector<5x32xf32> to vector<1x5x32xf32>
    tpu.vector_store %arg6[%c0_10, %c0_11, %c0_12], %16 {strides = array<i32>} : memref<1x5x32xf32, #tpu.memory_space<vmem>>, vector<1x5x32xf32>,
    return
  }
  func.func @transform_0(%arg0: i32) -> (i32, i32, i32) {
    %c0_i32 = arith.constant 0 : i32
    %c0_i32_0 = arith.constant 0 : i32
    %c0_i32_1 = arith.constant 0 : i32
    return %arg0, %c0_i32, %c0_i32_0 : i32, i32, i32
  }
  func.func @transform_1(%arg0: i32) -> (i32, i32) {
    %c0_i32 = arith.constant 0 : i32
    %c0_i32_0 = arith.constant 0 : i32
    %c0_i32_1 = arith.constant 0 : i32
    return %c0_i32, %c0_i32_0 : i32, i32
  }
  func.func @transform_2(%arg0: i32) -> (i32, i32) {
    %c0_i32 = arith.constant 0 : i32
    %c0_i32_0 = arith.constant 0 : i32
    %c0_i32_1 = arith.constant 0 : i32
    return %c0_i32, %c0_i32_0 : i32, i32
  }
  func.func @transform_3(%arg0: i32) -> (i32, i32) {
    %c0_i32 = arith.constant 0 : i32
    %c0_i32_0 = arith.constant 0 : i32
    %c0_i32_1 = arith.constant 0 : i32
    return %c0_i32, %c0_i32_0 : i32, i32
  }
  func.func @transform_4(%arg0: i32) -> (i32, i32) {
    %c0_i32 = arith.constant 0 : i32
    %c0_i32_0 = arith.constant 0 : i32
    %c0_i32_1 = arith.constant 0 : i32
    return %c0_i32, %c0_i32_0 : i32, i32
  }
  func.func @transform_5(%arg0: i32) -> (i32, i32, i32) {
    %c0_i32 = arith.constant 0 : i32
    %c0_i32_0 = arith.constant 0 : i32
    %c0_i32_1 = arith.constant 0 : i32
    return %arg0, %c0_i32, %c0_i32_0 : i32, i32, i32
  }
}

</mosaic_0001>

<llo_original>
// kernel: tpu_custom_call.1
$region0: #{tpu_custom_call.1}
  #allocation0 [shape = 'u32[]', space=smem, size = 0x4, offset = 0x4, fixed_abs, tag = 'smem constant byte address 0x4 - core index']
  #allocation1 [shape = 'u32[144,128]{1,0:T(1,128)}', space=vmem, size = 0x12000, scoped, tag = 'internal scratch']
  %s0 = inlined_call_operand.vmem [shape: f32[2,4,256], index: 0, kind: input, shape index: {}]
  %s1 = inlined_call_operand.vmem [shape: f32[256,32], index: 1, kind: input, shape index: {}]
  %s2 = inlined_call_operand.vmem [shape: f32[1,32], index: 2, kind: input, shape index: {}]
  %s3 = inlined_call_operand.vmem [shape: f32[1,32], index: 3, kind: input, shape index: {}]
  %s4 = inlined_call_operand.vmem [shape: f32[5,32], index: 4, kind: input, shape index: {}]
  %s5 = inlined_call_operand.vmem [shape: f32[2,5,32], index: 5, kind: output, shape index: {}]
  %s6 = sld [smem:[#allocation0]]
  $region53: #{tpu_custom_call.1} parent=0
    _
  %s8 = ssub.s32 1, %s6
  %s9 = scalar_select 0, %s8, %s6
  loop: start=0, step=1, limit=4
  $region2: #{tpu_custom_call.1} parent=0 // loop_pre_header
    _
  $region3: #{tpu_custom_call.1} parent=0 // loop_header
    %s11 = sphi 0, %s15
    %p12 = scmp.ge.s32.totalorder %s11, 4
    %s21 = sphi 0, %s23
    %s24 = sphi 0, %s21
    %s25 = sphi 0, %s24
    %s41 = sphi 0, %s25
    %s45 = sphi 0, %s45
    %s47 = sphi 0, %s45
    %s48 = sphi 0, %s47
    %s62 = sphi 0, %s48
    %s66 = sphi 0, %s66
    %s68 = sphi 0, %s66
    %s69 = sphi 0, %s68
    %s83 = sphi 0, %s69
    %s87 = sphi 0, %s87
    %s89 = sphi 0, %s87
    %s90 = sphi 0, %s89
    %s104 = sphi 0, %s90
    %s108 = sphi 0, %s108
    %s110 = sphi 0, %s108
    %s111 = sphi 0, %s110
    %s125 = sphi 0, %s111
    %s131 = sphi 0, %s133
    %s134 = sphi 0, %s131
    %s135 = sphi 0, %s134
    %s151 = sphi 0, %s135
  $region4: #{tpu_custom_call.1} parent=0 // loop_header_branch
    %14 = sbr.rel (%p12) target = $region8
  $region5: #{tpu_custom_call.1} parent=0 // loop_body
    %s16 = ssub.s32 %s11, 1
    %s17 = ssub.s32 %s11, 2
    %s18 = sadd.s32 %s11, 1
    %s19 = ssub.s32 %s11, %s18
    %p20 = scmp.eq.s32.totalorder %s19, 0
    %s22 = sadd.s32 %s21, 1
    %s23 = scalar_select %p20, %s21, %s22
    %p26 = pneg %p20
    %p27 = scmp.eq.s32.totalorder %s11, 1
    %p28 = por %p26, %p27
    %p29 = scmp.ne.s32.totalorder %s21, %s24
    %p30 = scmp.eq.s32.totalorder %s11, 0
    %p31 = por %p29, %p30
    %p32 = scmp.ne.s32.totalorder %s21, %s24
    %p33 = scmp.eq.s32.totalorder %s16, 1
    %p34 = por %p32, %p33
    %p35 = scmp.ne.s32.totalorder %s24, %s25
    %p36 = scmp.eq.s32.totalorder %s16, 0
    %p37 = por %p35, %p36
    %p38 = scmp.ne.s32.totalorder %s24, %s25
    %p39 = scmp.eq.s32.totalorder %s17, 1
    %p40 = por %p38, %p39
    %p42 = scmp.ne.s32.totalorder %s25, %s41
    %p43 = scmp.eq.s32.totalorder %s17, 0
    %p44 = por %p42, %p43
    %s46 = sadd.s32 %s45, 1
    %p49 = scmp.eq.s32.totalorder %s11, 1
    %p50 = scmp.ne.s32.totalorder %s45, %s47
    %p51 = scmp.eq.s32.totalorder %s11, 0
    %p52 = por %p50, %p51
    %p53 = scmp.ne.s32.totalorder %s45, %s47
    %p54 = scmp.eq.s32.totalorder %s16, 1
    %p55 = por %p53, %p54
    %p56 = scmp.ne.s32.totalorder %s47, %s48
    %p57 = scmp.eq.s32.totalorder %s16, 0
    %p58 = por %p56, %p57
    %p59 = scmp.ne.s32.totalorder %s47, %s48
    %p60 = scmp.eq.s32.totalorder %s17, 1
    %p61 = por %p59, %p60
    %p63 = scmp.ne.s32.totalorder %s48, %s62
    %p64 = scmp.eq.s32.totalorder %s17, 0
    %p65 = por %p63, %p64
    %s67 = sadd.s32 %s66, 1
    %p70 = scmp.eq.s32.totalorder %s11, 1
    %p71 = scmp.ne.s32.totalorder %s66, %s68
    %p72 = scmp.eq.s32.totalorder %s11, 0
    %p73 = por %p71, %p72
    %p74 = scmp.ne.s32.totalorder %s66, %s68
    %p75 = scmp.eq.s32.totalorder %s16, 1
    %p76 = por %p74, %p75
    %p77 = scmp.ne.s32.totalorder %s68, %s69
    %p78 = scmp.eq.s32.totalorder %s16, 0
    %p79 = por %p77, %p78
    %p80 = scmp.ne.s32.totalorder %s68, %s69
    %p81 = scmp.eq.s32.totalorder %s17, 1
    %p82 = por %p80, %p81
    %p84 = scmp.ne.s32.totalorder %s69, %s83
    %p85 = scmp.eq.s32.totalorder %s17, 0
    %p86 = por %p84, %p85
    %s88 = sadd.s32 %s87, 1
    %p91 = scmp.eq.s32.totalorder %s11, 1
    %p92 = scmp.ne.s32.totalorder %s87, %s89
    %p93 = scmp.eq.s32.totalorder %s11, 0
    %p94 = por %p92, %p93
    %p95 = scmp.ne.s32.totalorder %s87, %s89
    %p96 = scmp.eq.s32.totalorder %s16, 1
    %p97 = por %p95, %p96
    %p98 = scmp.ne.s32.totalorder %s89, %s90
    %p99 = scmp.eq.s32.totalorder %s16, 0
    %p100 = por %p98, %p99
    %p101 = scmp.ne.s32.totalorder %s89, %s90
    %p102 = scmp.eq.s32.totalorder %s17, 1
    %p103 = por %p101, %p102
    %p105 = scmp.ne.s32.totalorder %s90, %s104
    %p106 = scmp.eq.s32.totalorder %s17, 0
    %p107 = por %p105, %p106
    %s109 = sadd.s32 %s108, 1
    %p112 = scmp.eq.s32.totalorder %s11, 1
    %p113 = scmp.ne.s32.totalorder %s108, %s110
    %p114 = scmp.eq.s32.totalorder %s11, 0
    %p115 = por %p113, %p114
    %p116 = scmp.ne.s32.totalorder %s108, %s110
    %p117 = scmp.eq.s32.totalorder %s16, 1
    %p118 = por %p116, %p117
    %p119 = scmp.ne.s32.totalorder %s110, %s111
    %p120 = scmp.eq.s32.totalorder %s16, 0
    %p121 = por %p119, %p120
    %p122 = scmp.ne.s32.totalorder %s110, %s111
    %p123 = scmp.eq.s32.totalorder %s17, 1
    %p124 = por %p122, %p123
    %p126 = scmp.ne.s32.totalorder %s111, %s125
    %p127 = scmp.eq.s32.totalorder %s17, 0
    %p128 = por %p126, %p127
    %s129 = ssub.s32 %s11, %s18
    %p130 = scmp.eq.s32.totalorder %s129, 0
    %s132 = sadd.s32 %s131, 1
    %s133 = scalar_select %p130, %s131, %s132
    %p136 = pneg %p130
    %p137 = scmp.eq.s32.totalorder %s11, 1
    %p138 = por %p136, %p137
    %p139 = scmp.ne.s32.totalorder %s131, %s134
    %p140 = scmp.eq.s32.totalorder %s11, 0
    %p141 = por %p139, %p140
    %p142 = scmp.ne.s32.totalorder %s131, %s134
    %p143 = scmp.eq.s32.totalorder %s16, 1
    %p144 = por %p142, %p143
    %p145 = scmp.ne.s32.totalorder %s134, %s135
    %p146 = scmp.eq.s32.totalorder %s16, 0
    %p147 = por %p145, %p146
    %p148 = scmp.ne.s32.totalorder %s134, %s135
    %p149 = scmp.eq.s32.totalorder %s17, 1
    %p150 = por %p148, %p149
    %p152 = scmp.ne.s32.totalorder %s135, %s151
    %p153 = scmp.eq.s32.totalorder %s17, 0
    %p154 = por %p152, %p153
    %p155 = scmp.le.s32.totalorder 1, %s11
    %p156 = scmp.lt.s32.totalorder %s11, 3
    %p157 = pnand %p155, %p156
    %p158 = pneg %p157
    // Predicated region
    $region9: #{tpu_custom_call.1} parent=5 // pred_check
      _
    $region10: #{tpu_custom_call.1} parent=5 // pred_check_branch
      %160 = sbr.rel (%p157) target = $region12
    $region11: #{tpu_custom_call.1} parent=5 // pred_region
      %s161 = ssub.s32 %s11, 1
      // Predicated region
      $region13: #{tpu_custom_call.1} parent=11 // pred_check
        %p162 = pneg %p58
      $region14: #{tpu_custom_call.1} parent=11 // pred_check_branch
        %164 = sbr.rel (%p162) target = $region16
      $region15: #{tpu_custom_call.1} parent=11 // pred_region
        _
      $region16: #{tpu_custom_call.1} parent=11 // pred_fallthru
        _
      // Predicated region
      $region17: #{tpu_custom_call.1} parent=11 // pred_check
        %p165 = pneg %p79
      $region18: #{tpu_custom_call.1} parent=11 // pred_check_branch
        %167 = sbr.rel (%p165) target = $region20
      $region19: #{tpu_custom_call.1} parent=11 // pred_region
        _
      $region20: #{tpu_custom_call.1} parent=11 // pred_fallthru
        _
      // Predicated region
      $region21: #{tpu_custom_call.1} parent=11 // pred_check
        %p168 = pneg %p100
      $region22: #{tpu_custom_call.1} parent=11 // pred_check_branch
        %170 = sbr.rel (%p168) target = $region24
      $region23: #{tpu_custom_call.1} parent=11 // pred_region
        _
      $region24: #{tpu_custom_call.1} parent=11 // pred_fallthru
        _
      // Predicated region
      $region25: #{tpu_custom_call.1} parent=11 // pred_check
        %p171 = pneg %p121
      $region26: #{tpu_custom_call.1} parent=11 // pred_check_branch
        %173 = sbr.rel (%p171) target = $region28
      $region27: #{tpu_custom_call.1} parent=11 // pred_region
        _
      $region28: #{tpu_custom_call.1} parent=11 // pred_fallthru
        _
    $region12: #{tpu_custom_call.1} parent=5 // pred_fallthru
      _
    %p174 = scmp.lt.s32.totalorder %s11, 2
    // Predicated region
    $region29: #{tpu_custom_call.1} parent=5 // pred_check
      %p175 = pneg %p174
    $region30: #{tpu_custom_call.1} parent=5 // pred_check_branch
      %177 = sbr.rel (%p175) target = $region32
    $region31: #{tpu_custom_call.1} parent=5 // pred_region
      // Predicated region
      $region33: #{tpu_custom_call.1} parent=31 // pred_check
        %p178 = pneg %p31
      $region34: #{tpu_custom_call.1} parent=31 // pred_check_branch
        %180 = sbr.rel (%p178) target = $region36
      $region35: #{tpu_custom_call.1} parent=31 // pred_region
        %p181 = scmp.lt.s32.totalorder %s11, 1
        %s182 = scalar_select %p181, %s11, 1
        %s183 = smul.addr %s182, 2
        %s184 = smul.addr %s183, 4
        %s185 = scalar_lea.vmem %s0, %s184
      $region36: #{tpu_custom_call.1} parent=31 // pred_fallthru
        _
    $region32: #{tpu_custom_call.1} parent=5 // pred_fallthru
      _
    %p186 = scmp.le.s32.totalorder 1, %s11
    %p187 = scmp.lt.s32.totalorder %s11, 3
    %p188 = pnand %p186, %p187
    %p189 = pneg %p188
    // Predicated region
    $region37: #{tpu_custom_call.1} parent=5 // pred_check
      _
    $region38: #{tpu_custom_call.1} parent=5 // pred_check_branch
      %191 = sbr.rel (%p188) target = $region40
    $region39: #{tpu_custom_call.1} parent=5 // pred_region
      %s192 = ssub.s32 %s11, 1
      %p193 = scmp.lt.s32.totalorder %s16, 1
      %s194 = scalar_select %p193, %s16, 1
      %s195 = smul.addr %s194, 2
      %s196 = smul.addr %s195, 4
      %s197 = scalar_lea.vmem %s0, %s196
      %p198 = pneg %p37
      %p199 = pneg %p34
      %p200 = pneg %p58
      %p201 = pneg %p55
      %p202 = pneg %p79
      %p203 = pneg %p76
      %p204 = pneg %p100
      %p205 = pneg %p97
      %p206 = pneg %p121
      %p207 = pneg %p118
      %p208 = pneg %p147
      %p209 = pneg %p144
      %p210 = scmp.lt.s32.totalorder %s16, 1
      %s211 = scalar_select %p210, %s16, 1
      %s212 = smul.addr %s211, 8
      %s213 = scalar_lea.vmem %s5, %s212
      %p214 = scmp.lt.s32.totalorder %s16, 1
      %s215 = scalar_select %p214, %s16, 1
      %s216 = smul.addr %s215, 2
      %s217 = smul.addr %s216, 4
      %s218 = scalar_lea.vmem %s0, %s217
      %p219 = scmp.lt.s32.totalorder %s16, 1
      %s220 = scalar_select %p219, %s16, 1
      %s221 = smul.addr %s220, 8
      %s222 = scalar_lea.vmem %s5, %s221
      %v223 = vld [vmem:[%s4] sm:$0x1f]
      %v224 = vld [vmem:[%s218] sm:$0xff]
      %v225 = vld [vmem:[%s1] sm:$0xff]
      %v226 = vld [vmem:[%s1 + $0x8] sm:$0xff]
      %v227 = vld [vmem:[%s1 + $0x10] sm:$0xff]
      %v228 = vld [vmem:[%s1 + $0x18] sm:$0xff]
      %v229 = vld [vmem:[%s1 + $0x20] sm:$0xff]
      %v230 = vld [vmem:[%s1 + $0x28] sm:$0xff]
      %v231 = vld [vmem:[%s1 + $0x30] sm:$0xff]
      %v232 = vld [vmem:[%s1 + $0x38] sm:$0xff]
      %v233 = vld [vmem:[%s1 + $0x40] sm:$0xff]
      %v234 = vld [vmem:[%s1 + $0x48] sm:$0xff]
      %v235 = vld [vmem:[%s1 + $0x50] sm:$0xff]
      %v236 = vld [vmem:[%s1 + $0x58] sm:$0xff]
      %v237 = vld [vmem:[%s1 + $0x60] sm:$0xff]
      %v238 = vld [vmem:[%s1 + $0x68] sm:$0xff]
      %v239 = vld [vmem:[%s1 + $0x70] sm:$0xff]
      %v240 = vld [vmem:[%s1 + $0x78] sm:$0xff]
      %v241 = vld [vmem:[%s1 + $0x80] sm:$0xff]
      %v242 = vld [vmem:[%s1 + $0x88] sm:$0xff]
      %v243 = vld [vmem:[%s1 + $0x90] sm:$0xff]
      %v244 = vld [vmem:[%s1 + $0x98] sm:$0xff]
      %v245 = vld [vmem:[%s1 + $0xa0] sm:$0xff]
      %v246 = vld [vmem:[%s1 + $0xa8] sm:$0xff]
      %v247 = vld [vmem:[%s1 + $0xb0] sm:$0xff]
      %v248 = vld [vmem:[%s1 + $0xb8] sm:$0xff]
      %v249 = vld [vmem:[%s1 + $0xc0] sm:$0xff]
      %v250 = vld [vmem:[%s1 + $0xc8] sm:$0xff]
      %v251 = vld [vmem:[%s1 + $0xd0] sm:$0xff]
      %v252 = vld [vmem:[%s1 + $0xd8] sm:$0xff]
      %v253 = vld [vmem:[%s1 + $0xe0] sm:$0xff]
      %v254 = vld [vmem:[%s1 + $0xe8] sm:$0xff]
      %v255 = vld [vmem:[%s1 + $0xf0] sm:$0xff]
      %v256 = vld [vmem:[%s1 + $0xf8] sm:$0xff]
      %v257 = vld [vmem:[%s2] sm:$0x1]
      %v259 = vlaneseq
      %v260 = vshrl.u32 %v259, 7
      %v261 = vsub.s32 0, %v260
      %v262 = vrot.slane %v257, %v261
      %v265 = vcombine.high %v224, %v224
      %267 = vmatprep.subr.mxu0 0.0
      %268 = vmatpush1.msra.mxu0 %v225
      %269 = vmatprep.subr.mxu0 0.0
      %270 = vmatpush1.msra.mxu0 %v226
      %271 = vmatprep.subr.mxu0 0.0
      %272 = vmatpush1.msra.mxu0 %v227
      %273 = vmatprep.subr.mxu0 0.0
      %274 = vmatpush1.msra.mxu0 %v228
      %275 = vmatprep.subr.mxu0 0.0
      %276 = vmatpush1.msra.mxu0 %v229
      %277 = vmatprep.subr.mxu0 0.0
      %278 = vmatpush1.msra.mxu0 %v230
      %279 = vmatprep.subr.mxu0 0.0
      %280 = vmatpush1.msra.mxu0 %v231
      %281 = vmatprep.subr.mxu0 0.0
      %282 = vmatpush1.msra.mxu0 %v232
      %283 = vmatprep.subr.mxu0 0.0
      %284 = vmatpush1.msra.mxu0 %v233
      %285 = vmatprep.subr.mxu0 0.0
      %286 = vmatpush1.msra.mxu0 %v234
      %287 = vmatprep.subr.mxu0 0.0
      %288 = vmatpush1.msra.mxu0 %v235
      %289 = vmatprep.subr.mxu0 0.0
      %290 = vmatpush1.msra.mxu0 %v236
      %291 = vmatprep.subr.mxu0 0.0
      %292 = vmatpush1.msra.mxu0 %v237
      %293 = vmatprep.subr.mxu0 0.0
      %294 = vmatpush1.msra.mxu0 %v238
      %295 = vmatprep.subr.mxu0 0.0
      %296 = vmatpush1.msra.mxu0 %v239
      %297 = vmatprep.subr.mxu0 0.0
      %298 = vmatpush1.msra.mxu0 %v240
      %299 = vmatprep.subr.mxu0 0.0
      %300 = vmatpush1.msra.mxu0 %v241
      %301 = vmatprep.subr.mxu0 0.0
      %302 = vmatpush1.msra.mxu0 %v242
      %303 = vmatprep.subr.mxu0 0.0
      %304 = vmatpush1.msra.mxu0 %v243
      %305 = vmatprep.subr.mxu0 0.0
      %306 = vmatpush1.msra.mxu0 %v244
      %307 = vmatprep.subr.mxu0 0.0
      %308 = vmatpush1.msra.mxu0 %v245
      %309 = vmatprep.subr.mxu0 0.0
      %310 = vmatpush1.msra.mxu0 %v246
      %311 = vmatprep.subr.mxu0 0.0
      %312 = vmatpush1.msra.mxu0 %v247
      %313 = vmatprep.subr.mxu0 0.0
      %314 = vmatpush1.msra.mxu0 %v248
      %315 = vmatprep.subr.mxu0 0.0
      %316 = vmatpush1.msra.mxu0 %v249
      %317 = vmatprep.subr.mxu0 0.0
      %318 = vmatpush1.msra.mxu0 %v250
      %319 = vmatprep.subr.mxu0 0.0
      %320 = vmatpush1.msra.mxu0 %v251
      %321 = vmatprep.subr.mxu0 0.0
      %322 = vmatpush1.msra.mxu0 %v252
      %323 = vmatprep.subr.mxu0 0.0
      %324 = vmatpush1.msra.mxu0 %v253
      %325 = vmatprep.subr.mxu0 0.0
      %326 = vmatpush1.msra.mxu0 %v254
      %327 = vmatprep.subr.mxu0 0.0
      %328 = vmatpush1.msra.mxu0 %v255
      %329 = vmatprep.subr.mxu0 0.0
      %330 = vmatpush1.msra.mxu0 %v256
      %331 = vmatprep.mubr.f32.mxu0 %v265
      %332 = vmatmul.mubr.f32.gmra.mrb[0].mxu0 %v224
      %v333 = vpop.f32.mrb[0].mxu0
      %v334 = vadd.f32 %v262, %v333
      %v335 = vpop.f32.mrb[0].mxu0
      %336 = vdwg.mxu0
      %v337 = vld [vmem:[%s3] sm:$0x1]
      %v338 = vadd.f32 %v337, %v223
      %v340 = vrot.slane %v223, 1
      %v342 = vadd.f32 %v334, %v340
      %v344 = vrot.slane %v342, 7
      %vm346 = vcmask 1040384
      %v347 = vsel %vm346, %v338, %v344
      %vm348 = vcmask 258048
      %349 = vst.msk [vmem:[%s222] sm:$0x1f] %vm348, %v347
      %p350 = scmp.lt.s32.totalorder %s16, 1
      %s351 = scalar_select %p350, %s16, 1
      %s352 = smul.addr %s351, 8
      %s353 = scalar_lea.vmem %s5, %s352
      // Predicated region
      $region41: #{tpu_custom_call.1} parent=39 // pred_check
        %p354 = pneg %p144
      $region42: #{tpu_custom_call.1} parent=39 // pred_check_branch
        %356 = sbr.rel (%p354) target = $region44
      $region43: #{tpu_custom_call.1} parent=39 // pred_region
        _
      $region44: #{tpu_custom_call.1} parent=39 // pred_fallthru
        _
    $region40: #{tpu_custom_call.1} parent=5 // pred_fallthru
      _
    %p357 = scmp.le.s32.totalorder 2, %s11
    // Predicated region
    $region45: #{tpu_custom_call.1} parent=5 // pred_check
      %p358 = pneg %p357
    $region46: #{tpu_custom_call.1} parent=5 // pred_check_branch
      %360 = sbr.rel (%p358) target = $region48
    $region47: #{tpu_custom_call.1} parent=5 // pred_region
      %s361 = ssub.s32 %s11, 2
      // Predicated region
      $region49: #{tpu_custom_call.1} parent=47 // pred_check
        %p362 = pneg %p150
      $region50: #{tpu_custom_call.1} parent=47 // pred_check_branch
        %364 = sbr.rel (%p362) target = $region52
      $region51: #{tpu_custom_call.1} parent=47 // pred_region
        %p365 = scmp.lt.s32.totalorder %s17, 1
        %s366 = scalar_select %p365, %s17, 1
        %s367 = smul.addr %s366, 8
        %s368 = scalar_lea.vmem %s5, %s367
      $region52: #{tpu_custom_call.1} parent=47 // pred_fallthru
        _
    $region48: #{tpu_custom_call.1} parent=5 // pred_fallthru
      _
  $region6: #{tpu_custom_call.1} parent=0 // loop_footer
    %s15 = sadd.s32 1, %s11
  $region7: #{tpu_custom_call.1} parent=0 // loop_footer_branch
    %10 = sbr.rel target = $region3
  $region8: #{tpu_custom_call.1} parent=0 // loop_exit
    _

</llo_original>
